<compile_context>
chip_gen: v7x
topology: tpu7x:2x2x1
jax: 0.10.0
libtpu: 0.0.40
codegen_flags: <defaults>
</compile_context>

<pallas_src>
import jax
import jax.numpy as jnp
from jax.experimental import pallas as pl
from jax.experimental.pallas import tpu as pltpu


def _round_up(x, m):
    return ((x + m - 1) // m) * m


def soft_attention_kernel(h_ref, asp_ref, whv_ref, wpx_ref, wattn_ref, out_ref):
    BB, T, H = h_ref.shape
    E = asp_ref.shape[-1]
    HE = H + E

    # Upcast (possibly bf16-streamed) inputs once; all math is f32.
    h3 = h_ref[...].astype(jnp.float32)                       # (BB, T, H)
    a3 = asp_ref[...].astype(jnp.float32)                     # (BB, T, E)

    # Fused w_h / w_v: [h | aspect] @ blockdiag(w_h^T, w_v^T).  Single MXU
    # push with K = H+E and one lane-dense tanh instead of two 32-lane ones.
    ha = jnp.concatenate(
        [h3.reshape(BB * T, H), a3.reshape(BB * T, E)], axis=-1)   # (BB*T, HE)
    hv = jnp.tanh(jnp.dot(ha, whv_ref[...],
                          preferred_element_type=jnp.float32))     # (BB*T, HE)

    # Attention logits: <hv, weight> per (batch, t) via broadcast-multiply +
    # lane reduce (VPU/XLU) into (BB, T); softmax runs over the lane axis.
    scores = jnp.sum(hv.reshape(BB, T, HE) * wattn_ref[...].reshape(1, 1, HE),
                     axis=-1)                                   # (BB, T)

    m = jnp.max(scores, axis=-1, keepdims=True)
    e = jnp.exp(scores - m)
    attn = e / jnp.sum(e, axis=-1, keepdims=True)               # (BB, T)

    # Attention-weighted sum over the sequence, and the last timestep.
    rx = jnp.sum(attn[:, :, None] * h3, axis=1)                 # (BB, H)
    hn = h3[:, T - 1, :]                                        # (BB, H)

    # Fused final projection: [rx | hn] @ [w_p^T ; w_x^T] (single K=2H matmul).
    rh = jnp.concatenate([rx, hn], axis=-1)                     # (BB, 2H)
    hs = jnp.tanh(jnp.dot(rh, wpx_ref[...],
                          preferred_element_type=jnp.float32))  # (BB, H)

    # TODO(synk): the H(<128)-lane output store stays lane-masked; a
    # (bb*H/128, 128) repack was considered but the in-kernel relayout cost /
    # lowering risk outweighs the tiny store saving at this output size.
    out_ref[...] = hs.astype(out_ref.dtype)


def soft_attention(h, aspect, w_h, w_v, w_p, w_x, weight, *,
                   block_b=None, stream_dtype=None):
    """h: (B,T,H), aspect: (B,T,E); w_* are PyTorch-style (out,in) matrices,
    weight is (H+E,).  Returns hs: (B,H) in h's original dtype.

    stream_dtype: optionally cast h/aspect (the HBM-dominant inputs) to e.g.
    jnp.bfloat16 before streaming; all in-kernel math stays f32.
    """
    out_dtype = h.dtype
    B, T, H = h.shape
    E = aspect.shape[-1]

    if stream_dtype is not None:
        h = h.astype(stream_dtype)
        aspect = aspect.astype(stream_dtype)
    itemsize = jnp.dtype(h.dtype).itemsize

    # ---- batch-block selection --------------------------------------------
    # Target ~1 MiB of h bytes per grid step (amortizes the ~0.35 us/step
    # pipeline overhead, reaches HBM roofline), capped at 1024 rows so the
    # f32 intermediates stay well inside scoped VMEM.
    if block_b is None:
        bb_target = min(1024, max(8, (1 << 20) // max(1, T * H * itemsize)))
        num_blocks = pl.cdiv(B, bb_target)
        # v7x megacore: prefer >=2 (even) grid steps when blocks stay large.
        if num_blocks == 1 and B >= 512:
            num_blocks = 2
        if num_blocks > 1 and num_blocks % 2:
            num_blocks += 1
        bb = max(8, _round_up(pl.cdiv(B, num_blocks), 8))   # balanced blocks
    else:
        bb = max(8, _round_up(min(block_b, B), 8))          # sanitize manual bb
    num_blocks = pl.cdiv(B, bb)
    B_pad = num_blocks * bb

    if B_pad != B:   # zero-pad tail (softmax over zero logits is finite; sliced away)
        h = jnp.pad(h, ((0, B_pad - B), (0, 0), (0, 0)))
        aspect = jnp.pad(aspect, ((0, B_pad - B), (0, 0), (0, 0)))

    # ---- weight prep (tiny; kept f32) ---------------------------------------
    f32 = jnp.float32
    whv = jnp.zeros((H + E, H + E), f32)
    whv = whv.at[:H, :H].set(w_h.T.astype(f32))
    whv = whv.at[H:, H:].set(w_v.T.astype(f32))              # blockdiag(w_h^T, w_v^T)
    wpx = jnp.concatenate([w_p.T.astype(f32), w_x.T.astype(f32)], axis=0)  # (2H, H)
    wattn = weight.astype(f32).reshape(1, H + E)

    flops = (2 * B_pad * T * (H + E) * (H + E)     # fused w_h/w_v matmul
             + 2 * B_pad * T * (H + E)             # score reduce
             + 2 * B_pad * T * H                   # rx reduce
             + 2 * B_pad * 2 * H * H)              # fused w_p/w_x matmul
    transcendentals = B_pad * T * (H + E) + B_pad * T + B_pad * H
    bytes_accessed = ((h.size + aspect.size) * itemsize
                      + B_pad * H * jnp.dtype(out_dtype).itemsize
                      + (whv.size + wpx.size + wattn.size) * 4)

    grid_spec = pltpu.PrefetchScalarGridSpec(
        num_scalar_prefetch=0,
        grid=(num_blocks,),
        in_specs=[
            pl.BlockSpec((bb, T, H), lambda b: (b, 0, 0)),      # h
            pl.BlockSpec((bb, T, E), lambda b: (b, 0, 0)),      # aspect
            pl.BlockSpec((H + E, H + E), lambda b: (0, 0)),     # blockdiag(w_h^T, w_v^T)
            pl.BlockSpec((2 * H, H), lambda b: (0, 0)),         # [w_p^T ; w_x^T]
            pl.BlockSpec((1, H + E), lambda b: (0, 0)),         # attention weight row
        ],
        out_specs=pl.BlockSpec((bb, H), lambda b: (b, 0)),
    )

    out = pl.pallas_call(
        soft_attention_kernel,
        out_shape=jax.ShapeDtypeStruct((B_pad, H), out_dtype),
        grid_spec=grid_spec,
        compiler_params=pltpu.CompilerParams(
            dimension_semantics=("parallel",),
            vmem_limit_bytes=32 * 1024 * 1024),
        cost_estimate=pl.CostEstimate(
            flops=flops,
            transcendentals=transcendentals,
            bytes_accessed=bytes_accessed),
    )(h, aspect, whv, wpx, wattn)

    return out[:B]


def soft_attention_ref(h, aspect, w_h, w_v, w_p, w_x, weight):
    """Pure-JAX reference reproducing the PyTorch forward."""
    hx = jnp.einsum("bth,oh->bto", h, w_h)
    vx = jnp.einsum("bte,oe->bto", aspect, w_v)
    hv = jnp.tanh(jnp.concatenate([hx, vx], axis=-1))
    scores = jnp.einsum("btd,d->bt", hv, weight)
    ax = jax.nn.softmax(scores, axis=-1)[:, None, :]          # (B,1,T)
    rx = jnp.squeeze(jnp.matmul(ax, h), axis=1)               # (B,H)
    hn = h[:, -1, :]
    hs = jnp.tanh(jnp.einsum("bh,oh->bo", rx, w_p)
                  + jnp.einsum("bh,oh->bo", hn, w_x))
    return hs


if __name__ == "__main__":
    T, H, E = 8, 32, 32

    key = jax.random.PRNGKey(0)
    k1, k2, k3, k4, k5 = jax.random.split(key, 5)

    # PyTorch nn.Linear weight shape = (out, in)
    scale = 1.0 / jnp.sqrt(jnp.float32(H))
    w_h = jax.random.uniform(k1, (H, H), jnp.float32, -scale, scale)
    w_v = jax.random.uniform(k2, (E, E), jnp.float32, -scale, scale)
    w_p = jax.random.uniform(k3, (H, H), jnp.float32, -scale, scale)
    w_x = jax.random.uniform(k4, (H, H), jnp.float32, -scale, scale)
    weight = jax.random.uniform(k5, (H + E,), jnp.float32, -scale, scale)

    # Case 1: tiny batch (B=2) -> single block, padded to the 8-row sublane
    # minimum and sliced back.
    kb = jax.random.split(jax.random.PRNGKey(1), 2)
    h1 = jax.random.normal(kb[0], (2, T, H), dtype=jnp.float32)
    a1 = jax.random.normal(kb[1], (2, T, E), dtype=jnp.float32)
    out1 = jax.block_until_ready(
        soft_attention(h1, a1, w_h, w_v, w_p, w_x, weight))
    ref1 = soft_attention_ref(h1, a1, w_h, w_v, w_p, w_x, weight)
    assert out1.shape == (2, H)
    assert jnp.allclose(out1, ref1, atol=1e-5, rtol=1e-5), "mismatch (B=2)"

    # Case 2: B=40 -> one balanced 40-row block, no tail padding.
    kb = jax.random.split(jax.random.PRNGKey(2), 2)
    h2 = jax.random.normal(kb[0], (40, T, H), dtype=jnp.float32)
    a2 = jax.random.normal(kb[1], (40, T, E), dtype=jnp.float32)
    out2 = jax.block_until_ready(
        soft_attention(h2, a2, w_h, w_v, w_p, w_x, weight))
    ref2 = soft_attention_ref(h2, a2, w_h, w_v, w_p, w_x, weight)
    assert out2.shape == (40, H)
    assert jnp.allclose(out2, ref2, atol=1e-5, rtol=1e-5), "mismatch (B=40)"

    # Case 3: explicit small block -> multi-step parallel grid + tail padding.
    out3 = jax.block_until_ready(
        soft_attention(h2, a2, w_h, w_v, w_p, w_x, weight, block_b=16))
    assert out3.shape == (40, H)
    assert jnp.allclose(out3, ref2, atol=1e-5, rtol=1e-5), "mismatch (B=40, bb=16)"

    # Case 4: bf16 streaming of h/aspect (halves HBM bytes on v6e/v7x).
    # Compare against the f32 reference evaluated on the same bf16-rounded
    # inputs (kernel math is f32, so only input rounding differs).
    out4 = jax.block_until_ready(
        soft_attention(h2, a2, w_h, w_v, w_p, w_x, weight,
                       stream_dtype=jnp.bfloat16))
    h2r = h2.astype(jnp.bfloat16).astype(jnp.float32)
    a2r = a2.astype(jnp.bfloat16).astype(jnp.float32)
    ref4 = soft_attention_ref(h2r, a2r, w_h, w_v, w_p, w_x, weight)
    assert out4.shape == (40, H)
    assert out4.dtype == jnp.float32
    assert jnp.allclose(out4, ref4, atol=1e-4, rtol=1e-4), "mismatch (bf16 stream)"

    print("KERNEL_OK")
</pallas_src>

<mosaic_0001>
module attributes {stable_mosaic.version = 11 : i64} {
  func.func @soft_attention_kernel(%arg0: i32, %arg1: memref<8x8x32xf32, #tpu.memory_space<vmem>>, %arg2: memref<8x8x32xf32, #tpu.memory_space<vmem>>, %arg3: memref<64x64xf32, #tpu.memory_space<vmem>>, %arg4: memref<64x32xf32, #tpu.memory_space<vmem>>, %arg5: memref<1x64xf32, #tpu.memory_space<vmem>>, %arg6: memref<8x32xf32, #tpu.memory_space<vmem>>) attributes {dimension_semantics = [#tpu.dimension_semantics<parallel>], iteration_bounds = array<i64: 1>, scalar_prefetch = 0 : i64, scratch_operands = 0 : i64, tpu.core_type = #tpu.core_type<tc>, window_params = [{transform_indices = @transform_0, window_bounds = array<i64: 8, 8, 32>}, {transform_indices = @transform_1, window_bounds = array<i64: 8, 8, 32>}, {pipeline_mode = #tpu.pipeline_mode<synchronous>, transform_indices = @transform_2, window_bounds = array<i64: 64, 64>}, {pipeline_mode = #tpu.pipeline_mode<synchronous>, transform_indices = @transform_3, window_bounds = array<i64: 64, 32>}, {pipeline_mode = #tpu.pipeline_mode<synchronous>, transform_indices = @transform_4, window_bounds = array<i64: 1, 64>}, {transform_indices = @transform_5, window_bounds = array<i64: 8, 32>}]} {
    %c0 = arith.constant 0 : index
    %c0_0 = arith.constant 0 : index
    %c0_1 = arith.constant 0 : index
    %0 = vector.load %arg1[%c0, %c0_0, %c0_1] : memref<8x8x32xf32, #tpu.memory_space<vmem>>, vector<8x8x32xf32>
    %c0_2 = arith.constant 0 : index
    %c0_3 = arith.constant 0 : index
    %c0_4 = arith.constant 0 : index
    %1 = vector.load %arg2[%c0_2, %c0_3, %c0_4] : memref<8x8x32xf32, #tpu.memory_space<vmem>>, vector<8x8x32xf32>
    %2 = vector.shape_cast %0 : vector<8x8x32xf32> to vector<64x32xf32>
    %3 = vector.shape_cast %1 : vector<8x8x32xf32> to vector<64x32xf32>
    %4 = tpu.concatenate %2, %3 in 1 : vector<64x32xf32>, vector<64x32xf32> -> vector<64x64xf32>
    %c0_5 = arith.constant 0 : index
    %c0_6 = arith.constant 0 : index
    %5 = vector.load %arg3[%c0_5, %c0_6] : memref<64x64xf32, #tpu.memory_space<vmem>>, vector<64x64xf32>
    %cst = arith.constant dense<0.000000e+00> : vector<64x64xf32>
    %6 = tpu.matmul %4, %5, %cst {dimension_numbers = #tpu.dot_dimension_numbers<[1], [0], [0], [1], [0, 0, 1, 1], [], []>} : vector<64x64xf32>, vector<64x64xf32>, vector<64x64xf32> -> vector<64x64xf32>
    %7 = math.tanh %6 : vector<64x64xf32>
    %8 = vector.shape_cast %7 : vector<64x64xf32> to vector<8x8x64xf32>
    %c0_7 = arith.constant 0 : index
    %c0_8 = arith.constant 0 : index
    %9 = vector.load %arg5[%c0_7, %c0_8] : memref<1x64xf32, #tpu.memory_space<vmem>>, vector<1x64xf32>
    %10 = vector.shape_cast %9 : vector<1x64xf32> to vector<1x1x64xf32>
    %11 = vector.broadcast %10 : vector<1x1x64xf32> to vector<8x8x64xf32>
    %12 = arith.mulf %8, %11 : vector<8x8x64xf32>
    %cst_9 = arith.constant dense<0.000000e+00> : vector<8x8xf32>
    %13 = vector.multi_reduction <add>, %12, %cst_9 [2] : vector<8x8x64xf32> to vector<8x8xf32>
    %cst_10 = arith.constant dense<0xFF800000> : vector<8xf32>
    %14 = vector.multi_reduction <maximumf>, %13, %cst_10 [1] : vector<8x8xf32> to vector<8xf32>
    %15 = vector.shape_cast %14 : vector<8xf32> to vector<8x1xf32>
    %16 = vector.broadcast %15 : vector<8x1xf32> to vector<8x8xf32>
    %17 = arith.subf %13, %16 : vector<8x8xf32>
    %18 = math.exp %17 : vector<8x8xf32>
    %cst_11 = arith.constant dense<0.000000e+00> : vector<8xf32>
    %19 = vector.multi_reduction <add>, %18, %cst_11 [1] : vector<8x8xf32> to vector<8xf32>
    %20 = vector.shape_cast %19 : vector<8xf32> to vector<8x1xf32>
    %21 = vector.broadcast %20 : vector<8x1xf32> to vector<8x8xf32>
    %22 = arith.divf %18, %21 : vector<8x8xf32>
    %23 = vector.shape_cast %22 : vector<8x8xf32> to vector<8x8x1xf32>
    %24 = vector.broadcast %23 : vector<8x8x1xf32> to vector<8x8x32xf32>
    %25 = arith.mulf %24, %0 : vector<8x8x32xf32>
    %cst_12 = arith.constant dense<0.000000e+00> : vector<8x32xf32>
    %26 = vector.multi_reduction <add>, %25, %cst_12 [1] : vector<8x8x32xf32> to vector<8x32xf32>
    %27 = vector.extract_strided_slice %0 {offsets = [0, 7, 0], sizes = [8, 1, 32], strides = [1, 1, 1]} : vector<8x8x32xf32> to vector<8x1x32xf32>
    %28 = vector.shape_cast %27 : vector<8x1x32xf32> to vector<8x32xf32>
    %29 = tpu.concatenate %26, %28 in 1 : vector<8x32xf32>, vector<8x32xf32> -> vector<8x64xf32>
    %c0_13 = arith.constant 0 : index
    %c0_14 = arith.constant 0 : index
    %30 = vector.load %arg4[%c0_13, %c0_14] : memref<64x32xf32, #tpu.memory_space<vmem>>, vector<64x32xf32>
    %cst_15 = arith.constant dense<0.000000e+00> : vector<8x32xf32>
    %31 = tpu.matmul %29, %30, %cst_15 {dimension_numbers = #tpu.dot_dimension_numbers<[1], [0], [0], [1], [0, 0, 1, 1], [], []>} : vector<8x64xf32>, vector<64x32xf32>, vector<8x32xf32> -> vector<8x32xf32>
    %32 = math.tanh %31 : vector<8x32xf32>
    %c0_16 = arith.constant 0 : index
    %c0_17 = arith.constant 0 : index
    %33 = vector.load %arg6[%c0_16, %c0_17] : memref<8x32xf32, #tpu.memory_space<vmem>>, vector<8x32xf32>
    tpu.vector_store %arg6[%c0_16, %c0_17], %32 {strides = array<i32>} : memref<8x32xf32, #tpu.memory_space<vmem>>, vector<8x32xf32>,
    return
  }
  func.func @transform_0(%arg0: i32) -> (i32, i32, i32) {
    %c0_i32 = arith.constant 0 : i32
    %c0_i32_0 = arith.constant 0 : i32
    %c0_i32_1 = arith.constant 0 : i32
    return %arg0, %c0_i32, %c0_i32_0 : i32, i32, i32
  }
  func.func @transform_1(%arg0: i32) -> (i32, i32, i32) {
    %c0_i32 = arith.constant 0 : i32
    %c0_i32_0 = arith.constant 0 : i32
    %c0_i32_1 = arith.constant 0 : i32
    return %arg0, %c0_i32, %c0_i32_0 : i32, i32, i32
  }
  func.func @transform_2(%arg0: i32) -> (i32, i32) {
    %c0_i32 = arith.constant 0 : i32
    %c0_i32_0 = arith.constant 0 : i32
    %c0_i32_1 = arith.constant 0 : i32
    return %c0_i32, %c0_i32_0 : i32, i32
  }
  func.func @transform_3(%arg0: i32) -> (i32, i32) {
    %c0_i32 = arith.constant 0 : i32
    %c0_i32_0 = arith.constant 0 : i32
    %c0_i32_1 = arith.constant 0 : i32
    return %c0_i32, %c0_i32_0 : i32, i32
  }
  func.func @transform_4(%arg0: i32) -> (i32, i32) {
    %c0_i32 = arith.constant 0 : i32
    %c0_i32_0 = arith.constant 0 : i32
    %c0_i32_1 = arith.constant 0 : i32
    return %c0_i32, %c0_i32_0 : i32, i32
  }
  func.func @transform_5(%arg0: i32) -> (i32, i32) {
    %c0_i32 = arith.constant 0 : i32
    %c0_i32_0 = arith.constant 0 : i32
    return %arg0, %c0_i32 : i32, i32
  }
}

</mosaic_0001>

<llo_original>
// kernel: tpu_custom_call.1
$region0: #{tpu_custom_call.1}
  #allocation0 [shape = 'u32[]', space=smem, size = 0x4, offset = 0x4, fixed_abs, tag = 'smem constant byte address 0x4 - core index']
  #allocation1 [shape = 'u32[144,128]{1,0:T(1,128)}', space=vmem, size = 0x12000, scoped, tag = 'internal scratch']
  %s0 = inlined_call_operand.vmem [shape: f32[8,8,32], index: 0, kind: input, shape index: {}]
  %s1 = inlined_call_operand.hbm [shape: f32[8,8,32], index: 1, kind: input, shape index: {}]
  %s2 = inlined_call_operand.hbm [shape: f32[64,64], index: 2, kind: input, shape index: {}]
  %s3 = inlined_call_operand.vmem [shape: f32[64,32], index: 3, kind: input, shape index: {}]
  %s4 = inlined_call_operand.vmem [shape: f32[1,64], index: 4, kind: input, shape index: {}]
  %s5 = inlined_call_operand.hbm [shape: f32[8,32], index: 5, kind: output, shape index: {}]
  %s6 = sld [smem:[#allocation0]]
  $region38: #{tpu_custom_call.1} parent=0
    _
  %s8 = ssub.s32 1, %s6
  %s9 = scalar_select 0, %s8, %s6
  $region1: #{tpu_custom_call.1} parent=0
    #allocation2 [shape = 'u8[32768]{0}', space=vmem, size = 0x8000, scoped, tag = 'input window, operand 1, single buffered']
    #allocation3 [shape = 's32[1]{0}', space=sflag, size = 0x4, scoped, tag = 'scoped memory for tpu_custom_call.1']
    #allocation4 [shape = 's32[1]{0}', space=sflag, size = 0x4, scoped, tag = 'scoped memory for tpu_custom_call.1']
    #allocation5 [shape = 'u8[32768]{0}', space=vmem, size = 0x8000, scoped, tag = 'input window, operand 2, single buffered']
    #allocation6 [shape = 's32[1]{0}', space=sflag, size = 0x4, scoped, tag = 'scoped memory for tpu_custom_call.1']
    #allocation7 [shape = 'u8[4096]{0}', space=vmem, size = 0x1000, scoped, tag = 'output window, operand 0, single buffered']
    %10 = vsyncpa [#allocation3], 0
    %11 = vsyncpa [#allocation6], 0
    %12 = vsyncpa [#allocation4], 0
    // Predicated region
    $region2: #{tpu_custom_call.1} parent=1 // pred_check
      _
    $region3: #{tpu_custom_call.1} parent=1 // pred_check_branch
      %14 = sbr.rel (0) target = $region5
    $region4: #{tpu_custom_call.1} parent=1 // pred_region
      _
    $region5: #{tpu_custom_call.1} parent=1 // pred_fallthru
      _
    // Predicated region
    $region6: #{tpu_custom_call.1} parent=1 // pred_check
      _
    $region7: #{tpu_custom_call.1} parent=1 // pred_check_branch
      %16 = sbr.rel (0) target = $region9
    $region8: #{tpu_custom_call.1} parent=1 // pred_region
      %s18 = ssub.s32 1024, 1024
      %19 = vsyncadd [#allocation3], %s18
      %s20 = sshll.u32 [#allocation2], 4
      %s21 = int_to_ptr.vmem [resolvable:$true] %s20
      %26 = dma.hbm_to_vmem [thread:$0]  %s1, 1024, %s21, [#allocation3], 128, 128, 8
    $region9: #{tpu_custom_call.1} parent=1 // pred_fallthru
      _
    // Predicated region
    $region10: #{tpu_custom_call.1} parent=1 // pred_check
      _
    $region11: #{tpu_custom_call.1} parent=1 // pred_check_branch
      %28 = sbr.rel (0) target = $region13
    $region12: #{tpu_custom_call.1} parent=1 // pred_region
      %s30 = ssub.s32 1024, 1024
      %31 = vsyncadd [#allocation6], %s30
      %s32 = sshll.u32 [#allocation5], 4
      %s33 = int_to_ptr.vmem [resolvable:$true] %s32
      %38 = dma.hbm_to_vmem [thread:$0]  %s2, 1024, %s33, [#allocation6], 128, 128, 8
    $region13: #{tpu_custom_call.1} parent=1 // pred_fallthru
      _
    // Predicated region
    $region14: #{tpu_custom_call.1} parent=1 // pred_check
      _
    $region15: #{tpu_custom_call.1} parent=1 // pred_check_branch
      %40 = sbr.rel (0) target = $region17
    $region16: #{tpu_custom_call.1} parent=1 // pred_region
      _
    $region17: #{tpu_custom_call.1} parent=1 // pred_fallthru
      _
    // Predicated region
    $region18: #{tpu_custom_call.1} parent=1 // pred_check
      _
    $region19: #{tpu_custom_call.1} parent=1 // pred_check_branch
      %42 = sbr.rel (0) target = $region21
    $region20: #{tpu_custom_call.1} parent=1 // pred_region
      _
    $region21: #{tpu_custom_call.1} parent=1 // pred_fallthru
      _
    // Predicated region
    $region22: #{tpu_custom_call.1} parent=1 // pred_check
      _
    $region23: #{tpu_custom_call.1} parent=1 // pred_check_branch
      %44 = sbr.rel (0) target = $region25
    $region24: #{tpu_custom_call.1} parent=1 // pred_region
      %45 = dma.done [#allocation3], 1024
    $region25: #{tpu_custom_call.1} parent=1 // pred_fallthru
      _
    // Predicated region
    $region26: #{tpu_custom_call.1} parent=1 // pred_check
      _
    $region27: #{tpu_custom_call.1} parent=1 // pred_check_branch
      %47 = sbr.rel (0) target = $region29
    $region28: #{tpu_custom_call.1} parent=1 // pred_region
      %48 = dma.done [#allocation6], 1024
    $region29: #{tpu_custom_call.1} parent=1 // pred_fallthru
      _
    %v49 = vld [vmem:[%s0] sm:$0xff]
    %v50 = vld [vmem:[%s0 + $0x8] sm:$0xff]
    %v51 = vld [vmem:[%s0 + $0x10] sm:$0xff]
    %v52 = vld [vmem:[%s0 + $0x18] sm:$0xff]
    %v53 = vld [vmem:[%s0 + $0x20] sm:$0xff]
    %v54 = vld [vmem:[%s0 + $0x28] sm:$0xff]
    %v55 = vld [vmem:[%s0 + $0x30] sm:$0xff]
    %v56 = vld [vmem:[%s0 + $0x38] sm:$0xff]
    %v57 = vld [vmem:[#allocation2] sm:$0xff]
    %v58 = vld [vmem:[#allocation2 + $0x8] sm:$0xff]
    %v59 = vld [vmem:[#allocation2 + $0x10] sm:$0xff]
    %v60 = vld [vmem:[#allocation2 + $0x18] sm:$0xff]
    %v61 = vld [vmem:[#allocation2 + $0x20] sm:$0xff]
    %v62 = vld [vmem:[#allocation2 + $0x28] sm:$0xff]
    %v63 = vld [vmem:[#allocation2 + $0x30] sm:$0xff]
    %v64 = vld [vmem:[#allocation2 + $0x38] sm:$0xff]
    %73 = vrot.lane.b32.xlu0 %v57, 32
    %v74 = vpop.permute.xlu0 %73
    %75 = vrot.lane.b32.xlu0 %v58, 32
    %v76 = vpop.permute.xlu0 %75
    %77 = vrot.lane.b32.xlu0 %v59, 32
    %v78 = vpop.permute.xlu0 %77
    %79 = vrot.lane.b32.xlu0 %v60, 32
    %v80 = vpop.permute.xlu0 %79
    %81 = vrot.lane.b32.xlu0 %v61, 32
    %v82 = vpop.permute.xlu0 %81
    %83 = vrot.lane.b32.xlu0 %v62, 32
    %v84 = vpop.permute.xlu0 %83
    %85 = vrot.lane.b32.xlu0 %v63, 32
    %v86 = vpop.permute.xlu0 %85
    %87 = vrot.lane.b32.xlu0 %v64, 32
    %v88 = vpop.permute.xlu0 %87
    %vm97 = vcmask 261120
    %v98 = vsel %vm97, %v49, %v74
    %v99 = vsel %vm97, %v50, %v76
    %v100 = vsel %vm97, %v51, %v78
    %v101 = vsel %vm97, %v52, %v80
    %v102 = vsel %vm97, %v53, %v82
    %v103 = vsel %vm97, %v54, %v84
    %v104 = vsel %vm97, %v55, %v86
    %v105 = vsel %vm97, %v56, %v88
    %v106 = vld [vmem:[#allocation5] sm:$0xff]
    %v107 = vld [vmem:[#allocation5 + $0x8] sm:$0xff]
    %v108 = vld [vmem:[#allocation5 + $0x10] sm:$0xff]
    %v109 = vld [vmem:[#allocation5 + $0x18] sm:$0xff]
    %v110 = vld [vmem:[#allocation5 + $0x20] sm:$0xff]
    %v111 = vld [vmem:[#allocation5 + $0x28] sm:$0xff]
    %v112 = vld [vmem:[#allocation5 + $0x30] sm:$0xff]
    %v113 = vld [vmem:[#allocation5 + $0x38] sm:$0xff]
    %vm114 = vcmask 523264
    %v116 = vsel %vm114, %v98, 0
    %v119 = vsel %vm114, %v99, 0
    %v122 = vsel %vm114, %v100, 0
    %v125 = vsel %vm114, %v101, 0
    %v128 = vsel %vm114, %v102, 0
    %v131 = vsel %vm114, %v103, 0
    %v134 = vsel %vm114, %v104, 0
    %v137 = vsel %vm114, %v105, 0
    %139 = vmatprep.subr.mxu0 0.0
    %140 = vmatpush1.msra.mxu0 %v106
    %141 = vmatprep.subr.mxu0 0.0
    %142 = vmatpush1.msra.mxu0 %v107
    %143 = vmatprep.subr.mxu0 0.0
    %144 = vmatpush1.msra.mxu0 %v108
    %145 = vmatprep.subr.mxu0 0.0
    %146 = vmatpush1.msra.mxu0 %v109
    %147 = vmatprep.subr.mxu0 0.0
    %148 = vmatpush1.msra.mxu0 %v110
    %149 = vmatprep.subr.mxu0 0.0
    %150 = vmatpush1.msra.mxu0 %v111
    %151 = vmatprep.subr.mxu0 0.0
    %152 = vmatpush1.msra.mxu0 %v112
    %153 = vmatprep.subr.mxu0 0.0
    %154 = vmatpush1.msra.mxu0 %v113
    %155 = vmatprep.subr.mxu0 0.0
    %156 = vmatpush1.msra.mxu0 0.0
    %157 = vmatprep.subr.mxu0 0.0
    %158 = vmatpush1.msra.mxu0 0.0
    %159 = vmatprep.subr.mxu0 0.0
    %160 = vmatpush1.msra.mxu0 0.0
    %161 = vmatprep.subr.mxu0 0.0
    %162 = vmatpush1.msra.mxu0 0.0
    %163 = vmatprep.subr.mxu0 0.0
    %164 = vmatpush1.msra.mxu0 0.0
    %165 = vmatprep.subr.mxu0 0.0
    %166 = vmatpush1.msra.mxu0 0.0
    %167 = vmatprep.subr.mxu0 0.0
    %168 = vmatpush1.msra.mxu0 0.0
    %169 = vmatprep.subr.mxu0 0.0
    %170 = vmatpush1.msra.mxu0 0.0
    %171 = vmatprep.subr.mxu0 0.0
    %172 = vmatpush1.msra.mxu0 0.0
    %173 = vmatprep.subr.mxu0 0.0
    %174 = vmatpush1.msra.mxu0 0.0
    %175 = vmatprep.subr.mxu0 0.0
    %176 = vmatpush1.msra.mxu0 0.0
    %177 = vmatprep.subr.mxu0 0.0
    %178 = vmatpush1.msra.mxu0 0.0
    %179 = vmatprep.subr.mxu0 0.0
    %180 = vmatpush1.msra.mxu0 0.0
    %181 = vmatprep.subr.mxu0 0.0
    %182 = vmatpush1.msra.mxu0 0.0
    %183 = vmatprep.subr.mxu0 0.0
    %184 = vmatpush1.msra.mxu0 0.0
    %185 = vmatprep.subr.mxu0 0.0
    %186 = vmatpush1.msra.mxu0 0.0
    %187 = vmatprep.subr.mxu0 0.0
    %188 = vmatpush1.msra.mxu0 0.0
    %189 = vmatprep.subr.mxu0 0.0
    %190 = vmatpush1.msra.mxu0 0.0
    %191 = vmatprep.subr.mxu0 0.0
    %192 = vmatpush1.msra.mxu0 0.0
    %193 = vmatprep.subr.mxu0 0.0
    %194 = vmatpush1.msra.mxu0 0.0
    %195 = vmatprep.subr.mxu0 0.0
    %196 = vmatpush1.msra.mxu0 0.0
    %197 = vmatprep.subr.mxu0 0.0
    %198 = vmatpush1.msra.mxu0 0.0
    %199 = vmatprep.subr.mxu0 0.0
    %200 = vmatpush1.msra.mxu0 0.0
    %201 = vmatprep.subr.mxu0 0.0
    %202 = vmatpush1.msra.mxu0 0.0
    %203 = vmatprep.mubr.f32.mxu0 0.0
    %204 = vmatmul.mubr.f32.gmra.mrb[0].mxu0 %v116
    %v205 = vpop.f32.mrb[0].mxu0
    %v206 = vadd.f32 0.0, %v205
    %v207 = vpop.f32.mrb[0].mxu0
    %208 = vmatprep.mubr.f32.mxu0 0.0
    %209 = vmatmul.mubr.f32.gmra.mrb[0].mxu0 %v119
    %v210 = vpop.f32.mrb[0].mxu0
    %v211 = vadd.f32 0.0, %v210
    %v212 = vpop.f32.mrb[0].mxu0
    %213 = vmatprep.mubr.f32.mxu0 0.0
    %214 = vmatmul.mubr.f32.gmra.mrb[0].mxu0 %v122
    %v215 = vpop.f32.mrb[0].mxu0
    %v216 = vadd.f32 0.0, %v215
    %v217 = vpop.f32.mrb[0].mxu0
    %218 = vmatprep.mubr.f32.mxu0 0.0
    %219 = vmatmul.mubr.f32.gmra.mrb[0].mxu0 %v125
    %v220 = vpop.f32.mrb[0].mxu0
    %v221 = vadd.f32 0.0, %v220
    %v222 = vpop.f32.mrb[0].mxu0
    %223 = vmatprep.mubr.f32.mxu0 0.0
    %224 = vmatmul.mubr.f32.gmra.mrb[0].mxu0 %v128
    %v225 = vpop.f32.mrb[0].mxu0
    %v226 = vadd.f32 0.0, %v225
    %v227 = vpop.f32.mrb[0].mxu0
    %228 = vmatprep.mubr.f32.mxu0 0.0
    %229 = vmatmul.mubr.f32.gmra.mrb[0].mxu0 %v131
    %v230 = vpop.f32.mrb[0].mxu0
    %v231 = vadd.f32 0.0, %v230
    %v232 = vpop.f32.mrb[0].mxu0
    %233 = vmatprep.mubr.f32.mxu0 0.0
    %234 = vmatmul.mubr.f32.gmra.mrb[0].mxu0 %v134
    %v235 = vpop.f32.mrb[0].mxu0
    %v236 = vadd.f32 0.0, %v235
    %v237 = vpop.f32.mrb[0].mxu0
    %238 = vmatprep.mubr.f32.mxu0 0.0
    %239 = vmatmul.mubr.f32.gmra.mrb[0].mxu0 %v137
    %v240 = vpop.f32.mrb[0].mxu0
    %v241 = vadd.f32 0.0, %v240
    %v242 = vpop.f32.mrb[0].mxu0
    %243 = vdwg.mxu0
    %v244 = vtanh.pop %v206
    %v245 = vtanh.pop %v211
    %v246 = vtanh.pop %v216
    %v247 = vtanh.pop %v221
    %v248 = vtanh.pop %v226
    %v249 = vtanh.pop %v231
    %v250 = vtanh.pop %v236
    %v251 = vtanh.pop %v241
    %v252 = vld [vmem:[%s4] sm:$0x1]
    %v254 = vlaneseq
    %v255 = vshrl.u32 %v254, 7
    %v256 = vsub.s32 0, %v255
    %v257 = vrot.slane %v252, %v256
    %v259 = vmul.f32 %v244, %v257
    %v260 = vmul.f32 %v245, %v257
    %v261 = vmul.f32 %v246, %v257
    %v262 = vmul.f32 %v247, %v257
    %v263 = vmul.f32 %v248, %v257
    %v264 = vmul.f32 %v249, %v257
    %v265 = vmul.f32 %v250, %v257
    %v266 = vmul.f32 %v251, %v257
    %v267 = vsel %vm114, %v259, 0.0
    %268 = vadd.xlane.f32.xlu0 %v267
    %v269 = vpop.xlane.xlu0 %268
    %v270 = vsel %vm114, %v260, 0.0
    %271 = vadd.xlane.f32.xlu0 %v270
    %v272 = vpop.xlane.xlu0 %271
    %v273 = vsel %vm114, %v261, 0.0
    %274 = vadd.xlane.f32.xlu0 %v273
    %v275 = vpop.xlane.xlu0 %274
    %v276 = vsel %vm114, %v262, 0.0
    %277 = vadd.xlane.f32.xlu0 %v276
    %v278 = vpop.xlane.xlu0 %277
    %v279 = vsel %vm114, %v263, 0.0
    %280 = vadd.xlane.f32.xlu0 %v279
    %v281 = vpop.xlane.xlu0 %280
    %v282 = vsel %vm114, %v264, 0.0
    %283 = vadd.xlane.f32.xlu0 %v282
    %v284 = vpop.xlane.xlu0 %283
    %v285 = vsel %vm114, %v265, 0.0
    %286 = vadd.xlane.f32.xlu0 %v285
    %v287 = vpop.xlane.xlu0 %286
    %v288 = vsel %vm114, %v266, 0.0
    %289 = vadd.xlane.f32.xlu0 %v288
    %v290 = vpop.xlane.xlu0 %289
    %v299 = vlaneseq
    %v300 = vand.u32 %v299, 127
    %v301 = vlaneseq
    %v302 = vshrl.u32 %v301, 7
    %v303 = vsub.s32 %v300, %v302
    %v304 = vrot.slane %v269, %v303
    %v305 = vlaneseq
    %v306 = vshrl.u32 %v305, 7
    %v307 = vsub.s32 %v300, %v306
    %v308 = vrot.slane %v272, %v307
    %v309 = vlaneseq
    %v310 = vshrl.u32 %v309, 7
    %v311 = vsub.s32 %v300, %v310
    %v312 = vrot.slane %v275, %v311
    %v313 = vlaneseq
    %v314 = vshrl.u32 %v313, 7
    %v315 = vsub.s32 %v300, %v314
    %v316 = vrot.slane %v278, %v315
    %v317 = vlaneseq
    %v318 = vshrl.u32 %v317, 7
    %v319 = vsub.s32 %v300, %v318
    %v320 = vrot.slane %v281, %v319
    %v321 = vlaneseq
    %v322 = vshrl.u32 %v321, 7
    %v323 = vsub.s32 %v300, %v322
    %v324 = vrot.slane %v284, %v323
    %v325 = vlaneseq
    %v326 = vshrl.u32 %v325, 7
    %v327 = vsub.s32 %v300, %v326
    %v328 = vrot.slane %v287, %v327
    %v329 = vlaneseq
    %v330 = vshrl.u32 %v329, 7
    %v331 = vsub.s32 %v300, %v330
    %v332 = vrot.slane %v290, %v331
    %vm333 = vcmask 1041409
    %v334 = vsel %vm333, %v308, %v304
    %vm335 = vcmask 1042434
    %v336 = vsel %vm335, %v312, %v334
    %vm337 = vcmask 1043459
    %v338 = vsel %vm337, %v316, %v336
    %vm339 = vcmask 1044484
    %v340 = vsel %vm339, %v320, %v338
    %vm341 = vcmask 1045509
    %v342 = vsel %vm341, %v324, %v340
    %vm343 = vcmask 1046534
    %v344 = vsel %vm343, %v328, %v342
    %vm345 = vcmask 1047559
    %v346 = vsel %vm345, %v332, %v344
    %vm348 = vcmask 64512
    %v349 = vsel %vm348, %v346, -inf
    %350 = vmax.xlane.f32.xlu0 %v349
    %v351 = vpop.xlane.xlu0 %350
    %v353 = vlaneseq
    %v354 = vshrl.u32 %v353, 7
    %v355 = vsub.s32 0, %v354
    %v356 = vrot.slane %v351, %v355
    %v357 = vlaneseq
    %v358 = vshrl.u32 %v357, 7
    %v359 = vsub.s32 1, %v358
    %v360 = vrot.slane %v351, %v359
    %v361 = vlaneseq
    %v362 = vshrl.u32 %v361, 7
    %v363 = vsub.s32 2, %v362
    %v364 = vrot.slane %v351, %v363
    %v365 = vlaneseq
    %v366 = vshrl.u32 %v365, 7
    %v367 = vsub.s32 3, %v366
    %v368 = vrot.slane %v351, %v367
    %v369 = vlaneseq
    %v370 = vshrl.u32 %v369, 7
    %v371 = vsub.s32 4, %v370
    %v372 = vrot.slane %v351, %v371
    %v373 = vlaneseq
    %v374 = vshrl.u32 %v373, 7
    %v375 = vsub.s32 5, %v374
    %v376 = vrot.slane %v351, %v375
    %v377 = vlaneseq
    %v378 = vshrl.u32 %v377, 7
    %v379 = vsub.s32 6, %v378
    %v380 = vrot.slane %v351, %v379
    %v381 = vlaneseq
    %v382 = vshrl.u32 %v381, 7
    %v383 = vsub.s32 7, %v382
    %v384 = vrot.slane %v351, %v383
    %v393 = vsub.f32 %v269, %v356
    %v394 = vsub.f32 %v272, %v360
    %v395 = vsub.f32 %v275, %v364
    %v396 = vsub.f32 %v278, %v368
    %v397 = vsub.f32 %v281, %v372
    %v398 = vsub.f32 %v284, %v376
    %v399 = vsub.f32 %v287, %v380
    %v400 = vsub.f32 %v290, %v384
    %v401 = vmul.f32 %v393, 1.442695
    %v402 = vpow.pop %v401
    %v403 = vmul.f32 %v394, 1.442695
    %v404 = vpow.pop %v403
    %v405 = vmul.f32 %v395, 1.442695
    %v406 = vpow.pop %v405
    %v407 = vmul.f32 %v396, 1.442695
    %v408 = vpow.pop %v407
    %v409 = vmul.f32 %v397, 1.442695
    %v410 = vpow.pop %v409
    %v411 = vmul.f32 %v398, 1.442695
    %v412 = vpow.pop %v411
    %v413 = vmul.f32 %v399, 1.442695
    %v414 = vpow.pop %v413
    %v415 = vmul.f32 %v400, 1.442695
    %v416 = vpow.pop %v415
    %425 = vset.pattern.permute.xlu0 0
    %426 = vperm.xlu0 %425, %v402
    %v427 = vpop.permute.xlu0 %426
    %428 = vset.pattern.permute.xlu0 0
    %429 = vperm.xlu0 %428, %v404
    %v430 = vpop.permute.xlu0 %429
    %431 = vset.pattern.permute.xlu0 0
    %432 = vperm.xlu0 %431, %v406
    %v433 = vpop.permute.xlu0 %432
    %434 = vset.pattern.permute.xlu0 0
    %435 = vperm.xlu0 %434, %v408
    %v436 = vpop.permute.xlu0 %435
    %437 = vset.pattern.permute.xlu0 0
    %438 = vperm.xlu0 %437, %v410
    %v439 = vpop.permute.xlu0 %438
    %440 = vset.pattern.permute.xlu0 0
    %441 = vperm.xlu0 %440, %v412
    %v442 = vpop.permute.xlu0 %441
    %443 = vset.pattern.permute.xlu0 0
    %444 = vperm.xlu0 %443, %v414
    %v445 = vpop.permute.xlu0 %444
    %446 = vset.pattern.permute.xlu0 0
    %447 = vperm.xlu0 %446, %v416
    %v448 = vpop.permute.xlu0 %447
    %v449 = vlaneseq
    %v450 = vshrl.u32 %v449, 7
    %v451 = vsub.s32 %v300, %v450
    %v452 = vrot.slane %v427, %v451
    %v453 = vlaneseq
    %v454 = vshrl.u32 %v453, 7
    %v455 = vsub.s32 %v300, %v454
    %v456 = vrot.slane %v430, %v455
    %v457 = vlaneseq
    %v458 = vshrl.u32 %v457, 7
    %v459 = vsub.s32 %v300, %v458
    %v460 = vrot.slane %v433, %v459
    %v461 = vlaneseq
    %v462 = vshrl.u32 %v461, 7
    %v463 = vsub.s32 %v300, %v462
    %v464 = vrot.slane %v436, %v463
    %v465 = vlaneseq
    %v466 = vshrl.u32 %v465, 7
    %v467 = vsub.s32 %v300, %v466
    %v468 = vrot.slane %v439, %v467
    %v469 = vlaneseq
    %v470 = vshrl.u32 %v469, 7
    %v471 = vsub.s32 %v300, %v470
    %v472 = vrot.slane %v442, %v471
    %v473 = vlaneseq
    %v474 = vshrl.u32 %v473, 7
    %v475 = vsub.s32 %v300, %v474
    %v476 = vrot.slane %v445, %v475
    %v477 = vlaneseq
    %v478 = vshrl.u32 %v477, 7
    %v479 = vsub.s32 %v300, %v478
    %v480 = vrot.slane %v448, %v479
    %v481 = vsel %vm333, %v456, %v452
    %v482 = vsel %vm335, %v460, %v481
    %v483 = vsel %vm337, %v464, %v482
    %v484 = vsel %vm339, %v468, %v483
    %v485 = vsel %vm341, %v472, %v484
    %v486 = vsel %vm343, %v476, %v485
    %v487 = vsel %vm345, %v480, %v486
    %v489 = vsel %vm348, %v487, 0.0
    %490 = vadd.xlane.f32.xlu0 %v489
    %v491 = vpop.xlane.xlu0 %490
    %v493 = vlaneseq
    %v494 = vshrl.u32 %v493, 7
    %v495 = vsub.s32 0, %v494
    %v496 = vrot.slane %v491, %v495
    %v497 = vlaneseq
    %v498 = vshrl.u32 %v497, 7
    %v499 = vsub.s32 1, %v498
    %v500 = vrot.slane %v491, %v499
    %v501 = vlaneseq
    %v502 = vshrl.u32 %v501, 7
    %v503 = vsub.s32 2, %v502
    %v504 = vrot.slane %v491, %v503
    %v505 = vlaneseq
    %v506 = vshrl.u32 %v505, 7
    %v507 = vsub.s32 3, %v506
    %v508 = vrot.slane %v491, %v507
    %v509 = vlaneseq
    %v510 = vshrl.u32 %v509, 7
    %v511 = vsub.s32 4, %v510
    %v512 = vrot.slane %v491, %v511
    %v513 = vlaneseq
    %v514 = vshrl.u32 %v513, 7
    %v515 = vsub.s32 5, %v514
    %v516 = vrot.slane %v491, %v515
    %v517 = vlaneseq
    %v518 = vshrl.u32 %v517, 7
    %v519 = vsub.s32 6, %v518
    %v520 = vrot.slane %v491, %v519
    %v521 = vlaneseq
    %v522 = vshrl.u32 %v521, 7
    %v523 = vsub.s32 7, %v522
    %v524 = vrot.slane %v491, %v523
    %v533 = vrcp.pop %v496
    %v534 = vmul.f32 %v402, %v533
    %v535 = vrcp.pop %v500
    %v536 = vmul.f32 %v404, %v535
    %v537 = vrcp.pop %v504
    %v538 = vmul.f32 %v406, %v537
    %v539 = vrcp.pop %v508
    %v540 = vmul.f32 %v408, %v539
    %v541 = vrcp.pop %v512
    %v542 = vmul.f32 %v410, %v541
    %v543 = vrcp.pop %v516
    %v544 = vmul.f32 %v412, %v543
    %v545 = vrcp.pop %v520
    %v546 = vmul.f32 %v414, %v545
    %v547 = vrcp.pop %v524
    %v548 = vmul.f32 %v416, %v547
    %550 = vset.pattern.permute.xlu0 0
    %551 = vperm.xlu0 %550, %v534
    %v552 = vpop.permute.xlu0 %551
    %555 = vset.pattern.permute.xlu0 0
    %556 = vperm.xlu0 %555, %v536
    %v557 = vpop.permute.xlu0 %556
    %560 = vset.pattern.permute.xlu0 0
    %561 = vperm.xlu0 %560, %v538
    %v562 = vpop.permute.xlu0 %561
    %565 = vset.pattern.permute.xlu0 0
    %566 = vperm.xlu0 %565, %v540
    %v567 = vpop.permute.xlu0 %566
    %570 = vset.pattern.permute.xlu0 0
    %571 = vperm.xlu0 %570, %v542
    %v572 = vpop.permute.xlu0 %571
    %575 = vset.pattern.permute.xlu0 0
    %576 = vperm.xlu0 %575, %v544
    %v577 = vpop.permute.xlu0 %576
    %580 = vset.pattern.permute.xlu0 0
    %581 = vperm.xlu0 %580, %v546
    %v582 = vpop.permute.xlu0 %581
    %585 = vset.pattern.permute.xlu0 0
    %586 = vperm.xlu0 %585, %v548
    %v587 = vpop.permute.xlu0 %586
    %v589 = vmul.f32 %v552, %v49
    %v590 = vmul.f32 %v557, %v50
    %v591 = vmul.f32 %v562, %v51
    %v592 = vmul.f32 %v567, %v52
    %v593 = vmul.f32 %v572, %v53
    %v594 = vmul.f32 %v577, %v54
    %v595 = vmul.f32 %v582, %v55
    %v596 = vmul.f32 %v587, %v56
    %v597 = vsel %vm97, %v589, 0.0
    %v598 = vrot.slane %v597, 4
    %v599 = vadd.f32 %v597, %v598
    %v600 = vrot.slane %v599, 2
    %v601 = vadd.f32 %v599, %v600
    %v602 = vrot.slane %v601, 1
    %v603 = vadd.f32 %v601, %v602
    %v604 = vsel %vm97, %v590, 0.0
    %v605 = vrot.slane %v604, 4
    %v606 = vadd.f32 %v604, %v605
    %v607 = vrot.slane %v606, 2
    %v608 = vadd.f32 %v606, %v607
    %v609 = vrot.slane %v608, 1
    %v610 = vadd.f32 %v608, %v609
    %v611 = vsel %vm97, %v591, 0.0
    %v612 = vrot.slane %v611, 4
    %v613 = vadd.f32 %v611, %v612
    %v614 = vrot.slane %v613, 2
    %v615 = vadd.f32 %v613, %v614
    %v616 = vrot.slane %v615, 1
    %v617 = vadd.f32 %v615, %v616
    %v618 = vsel %vm97, %v592, 0.0
    %v619 = vrot.slane %v618, 4
    %v620 = vadd.f32 %v618, %v619
    %v621 = vrot.slane %v620, 2
    %v622 = vadd.f32 %v620, %v621
    %v623 = vrot.slane %v622, 1
    %v624 = vadd.f32 %v622, %v623
    %v625 = vsel %vm97, %v593, 0.0
    %v626 = vrot.slane %v625, 4
    %v627 = vadd.f32 %v625, %v626
    %v628 = vrot.slane %v627, 2
    %v629 = vadd.f32 %v627, %v628
    %v630 = vrot.slane %v629, 1
    %v631 = vadd.f32 %v629, %v630
    %v632 = vsel %vm97, %v594, 0.0
    %v633 = vrot.slane %v632, 4
    %v634 = vadd.f32 %v632, %v633
    %v635 = vrot.slane %v634, 2
    %v636 = vadd.f32 %v634, %v635
    %v637 = vrot.slane %v636, 1
    %v638 = vadd.f32 %v636, %v637
    %v639 = vsel %vm97, %v595, 0.0
    %v640 = vrot.slane %v639, 4
    %v641 = vadd.f32 %v639, %v640
    %v642 = vrot.slane %v641, 2
    %v643 = vadd.f32 %v641, %v642
    %v644 = vrot.slane %v643, 1
    %v645 = vadd.f32 %v643, %v644
    %v646 = vsel %vm97, %v596, 0.0
    %v647 = vrot.slane %v646, 4
    %v648 = vadd.f32 %v646, %v647
    %v649 = vrot.slane %v648, 2
    %v650 = vadd.f32 %v648, %v649
    %v651 = vrot.slane %v650, 1
    %v652 = vadd.f32 %v650, %v651
    %v661 = vsel %vm333, %v610, %v603
    %v662 = vsel %vm335, %v617, %v661
    %v663 = vsel %vm337, %v624, %v662
    %v664 = vsel %vm339, %v631, %v663
    %v665 = vsel %vm341, %v638, %v664
    %v666 = vsel %vm343, %v645, %v665
    %v667 = vsel %vm345, %v652, %v666
    %v677 = vrot.slane %v49, 7
    %v678 = vrot.slane %v50, 6
    %v679 = vsel %vm333, %v678, %v677
    %v680 = vrot.slane %v51, 5
    %v681 = vsel %vm335, %v680, %v679
    %v682 = vrot.slane %v52, 4
    %v683 = vsel %vm337, %v682, %v681
    %v684 = vrot.slane %v53, 3
    %v685 = vsel %vm339, %v684, %v683
    %v686 = vrot.slane %v54, 2
    %v687 = vsel %vm341, %v686, %v685
    %v688 = vrot.slane %v55, 1
    %v689 = vsel %vm343, %v688, %v687
    %v690 = vsel %vm345, %v56, %v689
    %691 = vrot.lane.b32.xlu0 %v690, 32
    %v692 = vpop.permute.xlu0 %691
    %v694 = vsel %vm97, %v667, %v692
    %v695 = vld [vmem:[%s3] sm:$0xff]
    %v696 = vld [vmem:[%s3 + $0x8] sm:$0xff]
    %v697 = vld [vmem:[%s3 + $0x10] sm:$0xff]
    %v698 = vld [vmem:[%s3 + $0x18] sm:$0xff]
    %v699 = vld [vmem:[%s3 + $0x20] sm:$0xff]
    %v700 = vld [vmem:[%s3 + $0x28] sm:$0xff]
    %v701 = vld [vmem:[%s3 + $0x30] sm:$0xff]
    %v702 = vld [vmem:[%s3 + $0x38] sm:$0xff]
    %v704 = vsel %vm114, %v694, 0
    %706 = vmatprep.subr.mxu0 0.0
    %707 = vmatpush1.msra.mxu0 %v695
    %708 = vmatprep.subr.mxu0 0.0
    %709 = vmatpush1.msra.mxu0 %v696
    %710 = vmatprep.subr.mxu0 0.0
    %711 = vmatpush1.msra.mxu0 %v697
    %712 = vmatprep.subr.mxu0 0.0
    %713 = vmatpush1.msra.mxu0 %v698
    %714 = vmatprep.subr.mxu0 0.0
    %715 = vmatpush1.msra.mxu0 %v699
    %716 = vmatprep.subr.mxu0 0.0
    %717 = vmatpush1.msra.mxu0 %v700
    %718 = vmatprep.subr.mxu0 0.0
    %719 = vmatpush1.msra.mxu0 %v701
    %720 = vmatprep.subr.mxu0 0.0
    %721 = vmatpush1.msra.mxu0 %v702
    %722 = vmatprep.subr.mxu0 0.0
    %723 = vmatpush1.msra.mxu0 0.0
    %724 = vmatprep.subr.mxu0 0.0
    %725 = vmatpush1.msra.mxu0 0.0
    %726 = vmatprep.subr.mxu0 0.0
    %727 = vmatpush1.msra.mxu0 0.0
    %728 = vmatprep.subr.mxu0 0.0
    %729 = vmatpush1.msra.mxu0 0.0
    %730 = vmatprep.subr.mxu0 0.0
    %731 = vmatpush1.msra.mxu0 0.0
    %732 = vmatprep.subr.mxu0 0.0
    %733 = vmatpush1.msra.mxu0 0.0
    %734 = vmatprep.subr.mxu0 0.0
    %735 = vmatpush1.msra.mxu0 0.0
    %736 = vmatprep.subr.mxu0 0.0
    %737 = vmatpush1.msra.mxu0 0.0
    %738 = vmatprep.subr.mxu0 0.0
    %739 = vmatpush1.msra.mxu0 0.0
    %740 = vmatprep.subr.mxu0 0.0
    %741 = vmatpush1.msra.mxu0 0.0
    %742 = vmatprep.subr.mxu0 0.0
    %743 = vmatpush1.msra.mxu0 0.0
    %744 = vmatprep.subr.mxu0 0.0
    %745 = vmatpush1.msra.mxu0 0.0
    %746 = vmatprep.subr.mxu0 0.0
    %747 = vmatpush1.msra.mxu0 0.0
    %748 = vmatprep.subr.mxu0 0.0
    %749 = vmatpush1.msra.mxu0 0.0
    %750 = vmatprep.subr.mxu0 0.0
    %751 = vmatpush1.msra.mxu0 0.0
    %752 = vmatprep.subr.mxu0 0.0
    %753 = vmatpush1.msra.mxu0 0.0
    %754 = vmatprep.subr.mxu0 0.0
    %755 = vmatpush1.msra.mxu0 0.0
    %756 = vmatprep.subr.mxu0 0.0
    %757 = vmatpush1.msra.mxu0 0.0
    %758 = vmatprep.subr.mxu0 0.0
    %759 = vmatpush1.msra.mxu0 0.0
    %760 = vmatprep.subr.mxu0 0.0
    %761 = vmatpush1.msra.mxu0 0.0
    %762 = vmatprep.subr.mxu0 0.0
    %763 = vmatpush1.msra.mxu0 0.0
    %764 = vmatprep.subr.mxu0 0.0
    %765 = vmatpush1.msra.mxu0 0.0
    %766 = vmatprep.subr.mxu0 0.0
    %767 = vmatpush1.msra.mxu0 0.0
    %768 = vmatprep.subr.mxu0 0.0
    %769 = vmatpush1.msra.mxu0 0.0
    %770 = vmatprep.mubr.f32.mxu0 0.0
    %771 = vmatmul.mubr.f32.gmra.mrb[0].mxu0 %v704
    %v772 = vpop.f32.mrb[0].mxu0
    %v773 = vadd.f32 0.0, %v772
    %v774 = vpop.f32.mrb[0].mxu0
    %775 = vdwg.mxu0
    %v776 = vtanh.pop %v773
    %777 = vst.msk [vmem:[#allocation7] sm:$0xff] %vm97, %v776
    // Predicated region
    $region30: #{tpu_custom_call.1} parent=1 // pred_check
      _
    $region31: #{tpu_custom_call.1} parent=1 // pred_check_branch
      %779 = sbr.rel (0) target = $region33
    $region32: #{tpu_custom_call.1} parent=1 // pred_region
      %s781 = ssub.s32 128, 128
      %782 = vsyncadd [#allocation4], %s781
      %s784 = sshll.u32 [#allocation7], 4
      %s785 = int_to_ptr.vmem [resolvable:$true] %s784
      %787 = dma.vmem_to_hbm [thread:$0]  %s785, 128, %s5, [#allocation4]
    $region33: #{tpu_custom_call.1} parent=1 // pred_fallthru
      _
    // Predicated region
    $region34: #{tpu_custom_call.1} parent=1 // pred_check
      _
    $region35: #{tpu_custom_call.1} parent=1 // pred_check_branch
      %789 = sbr.rel (0) target = $region37
    $region36: #{tpu_custom_call.1} parent=1 // pred_region
      %790 = dma.done [#allocation4], 128
    $region37: #{tpu_custom_call.1} parent=1 // pred_fallthru
      _
    %791 = vsyncpa [#allocation3], 1
    %792 = vsyncpa [#allocation6], 1
    %793 = vsyncpa [#allocation4], 1

</llo_original>
